<compile_context>
chip_gen: v6e
topology: v6e:2x2x1
jax: 0.10.0
libtpu: 0.0.40
codegen_flags: <defaults>
</compile_context>

<pallas_src>
import functools

import jax
import jax.numpy as jnp
from jax.experimental import pallas as pl
from jax.experimental.pallas import tpu as pltpu


_LANE = 128     # lane width: feature dims padded to multiples of this
_SUBLANE = 8    # sublane width: batch tile is a multiple of this


def _round_up(n, m):
    return ((n + m - 1) // m) * m


# ----------------------------------------------------------------------------
# Fused MLP kernel
# ----------------------------------------------------------------------------
def _fused_mlp_kernel(x_ref, *refs, num_layers):
    """(Linear -> ReLU)^(L-1) -> Linear for one batch tile, fully in VMEM.

    refs = (w0, b0, w1, b1, ..., w_{L-1}, b_{L-1}, out_ref)
    All feature dims are pre-padded to 128-lane multiples (zero padding), so
    the chain stays numerically identical to the unpadded MLP while every
    matmul / store is lane-dense.  Matmul operands are bf16 (MXU-native) with
    f32 accumulation; bias-add and ReLU are done in f32 on the VPU.
    """
    o_ref = refs[-1]
    wb = refs[:-1]

    h = x_ref[...].astype(jnp.float32)
    for layer in range(num_layers):
        w_ref = wb[2 * layer]        # (in_pad, out_pad) bf16
        b_ref = wb[2 * layer + 1]    # (1, out_pad)      f32
        h = jnp.dot(
            h.astype(jnp.bfloat16), w_ref[...],
            preferred_element_type=jnp.float32,
        ) + b_ref[...]
        if layer < num_layers - 1:
            h = jnp.maximum(h, 0.0)
    o_ref[...] = h.astype(o_ref.dtype)


def dnn_forward_pallas(packed_params, x, out_features, batch_tile=_SUBLANE):
    """Whole-MLP forward as a single Pallas kernel.

    packed_params: list of (w_padded_bf16 (in_pad,out_pad), b_padded_f32 (1,out_pad))
    x:             (batch, in_features) float32
    Returns:       (batch, out_features) float32
    """
    batch, in_f = x.shape
    num_layers = len(packed_params)
    in_pad = packed_params[0][0].shape[0]
    out_pad = packed_params[-1][0].shape[1]

    # Batch tile: multiple of the 8-row sublane; pad batch up to a tile multiple.
    tb = min(batch_tile, _round_up(batch, _SUBLANE))
    b_pad = _round_up(batch, tb)
    x_pad = jnp.zeros((b_pad, in_pad), jnp.float32).at[:batch, :in_f].set(x)

    grid = (b_pad // tb,)

    in_specs = [pl.BlockSpec((tb, in_pad), lambda i: (i, 0))]
    args = [x_pad]
    for (w, b) in packed_params:
        k, n = w.shape
        in_specs.append(pl.BlockSpec((k, n), lambda i: (0, 0)))
        in_specs.append(pl.BlockSpec((1, n), lambda i: (0, 0)))
        args.append(w)
        args.append(b)

    kernel = functools.partial(_fused_mlp_kernel, num_layers=num_layers)
    out_padded = pl.pallas_call(
        kernel,
        out_shape=jax.ShapeDtypeStruct((b_pad, out_pad), jnp.float32),
        grid=grid,
        in_specs=in_specs,
        out_specs=pl.BlockSpec((tb, out_pad), lambda i: (i, 0)),
        compiler_params=pltpu.CompilerParams(
            # batch axis is independent -> lets v7x shard tiles across its 2 TCs
            dimension_semantics=("parallel",),
        ),
    )(*args)

    return out_padded[:batch, :out_features]


# ----------------------------------------------------------------------------
# Parameter construction (mimics PyTorch nn.Linear init) + packing
# ----------------------------------------------------------------------------
def init_dnn_params(layers, key):
    """Deterministic init mimicking nn.Linear's uniform(-1/sqrt(fan_in), ...).

    Weights are returned already transposed to (in_features, out_features), f32.
    """
    params = []
    for i in range(len(layers) - 1):
        fan_in, fan_out = layers[i], layers[i + 1]
        key, kw, kb = jax.random.split(key, 3)
        bound = 1.0 / jnp.sqrt(jnp.float32(fan_in))
        w = jax.random.uniform(kw, (fan_in, fan_out), jnp.float32, -bound, bound)
        b = jax.random.uniform(kb, (fan_out,), jnp.float32, -bound, bound)
        params.append((w, b))
    return params


def pack_params(params):
    """Zero-pad every layer to 128-lane-dense shapes; weights cast to bf16."""
    packed = []
    for (w, b) in params:
        in_f, out_f = w.shape
        in_p = _round_up(in_f, _LANE)
        out_p = _round_up(out_f, _LANE)
        w_p = jnp.zeros((in_p, out_p), jnp.bfloat16).at[:in_f, :out_f].set(
            w.astype(jnp.bfloat16))
        b_p = jnp.zeros((1, out_p), jnp.float32).at[0, :out_f].set(b)
        packed.append((w_p, b_p))
    return packed


# ----------------------------------------------------------------------------
# Pure-JAX references
# ----------------------------------------------------------------------------
def dnn_forward_ref_f32(params, x):
    """Exact f32 semantics of the PyTorch module."""
    depth = len(params)
    out = x
    for i, (w, b) in enumerate(params):
        out = out @ w + b
        if i < depth - 1:
            out = jnp.maximum(out, 0.0)
    return out


def dnn_forward_ref_bf16(params, x):
    """Same numeric path as the kernel (bf16 matmul operands, f32 accumulate)."""
    depth = len(params)
    out = x
    for i, (w, b) in enumerate(params):
        out = jnp.dot(out.astype(jnp.bfloat16), w.astype(jnp.bfloat16),
                      preferred_element_type=jnp.float32) + b
        if i < depth - 1:
            out = jnp.maximum(out, 0.0)
    return out


# ----------------------------------------------------------------------------
if __name__ == "__main__":
    # Small, forward-consistent shapes: layers spec like the PINN-style DNN.
    layers = [8, 32, 32, 4]   # in_dim=8, two hidden of 32, out_dim=4
    batch = 16

    key = jax.random.PRNGKey(0)
    key, kx = jax.random.split(key)
    x = jax.random.normal(kx, (batch, layers[0]), dtype=jnp.float32)

    params = init_dnn_params(layers, key)
    packed = pack_params(params)

    fwd = jax.jit(
        functools.partial(dnn_forward_pallas, out_features=layers[-1])
    )
    out = fwd(packed, x)
    out = jax.block_until_ready(out)

    assert out.shape == (batch, layers[-1])

    # Matches the bf16-matmul reference tightly (identical numeric path).
    ref_bf16 = dnn_forward_ref_bf16(params, x)
    assert jnp.allclose(out, ref_bf16, atol=1e-3, rtol=1e-3)

    # Matches the exact f32 module semantics up to bf16 quantization error.
    ref_f32 = dnn_forward_ref_f32(params, x)
    assert jnp.allclose(out, ref_f32, atol=5e-2, rtol=5e-2)

    print("KERNEL_OK")
</pallas_src>

<mosaic_0001>
module attributes {stable_mosaic.version = 11 : i64} {
  func.func @_fused_mlp_kernel(%arg0: i32, %arg1: memref<8x128xf32, #tpu.memory_space<vmem>>, %arg2: memref<128x128xbf16, #tpu.memory_space<vmem>>, %arg3: memref<1x128xf32, #tpu.memory_space<vmem>>, %arg4: memref<128x128xbf16, #tpu.memory_space<vmem>>, %arg5: memref<1x128xf32, #tpu.memory_space<vmem>>, %arg6: memref<128x128xbf16, #tpu.memory_space<vmem>>, %arg7: memref<1x128xf32, #tpu.memory_space<vmem>>, %arg8: memref<8x128xf32, #tpu.memory_space<vmem>>) attributes {dimension_semantics = [#tpu.dimension_semantics<parallel>], iteration_bounds = array<i64: 2>, scalar_prefetch = 0 : i64, scratch_operands = 0 : i64, tpu.core_type = #tpu.core_type<tc>, window_params = [{transform_indices = @transform_0, window_bounds = array<i64: 8, 128>}, {pipeline_mode = #tpu.pipeline_mode<synchronous>, transform_indices = @transform_1, window_bounds = array<i64: 128, 128>}, {pipeline_mode = #tpu.pipeline_mode<synchronous>, transform_indices = @transform_2, window_bounds = array<i64: 1, 128>}, {pipeline_mode = #tpu.pipeline_mode<synchronous>, transform_indices = @transform_3, window_bounds = array<i64: 128, 128>}, {pipeline_mode = #tpu.pipeline_mode<synchronous>, transform_indices = @transform_4, window_bounds = array<i64: 1, 128>}, {pipeline_mode = #tpu.pipeline_mode<synchronous>, transform_indices = @transform_5, window_bounds = array<i64: 128, 128>}, {pipeline_mode = #tpu.pipeline_mode<synchronous>, transform_indices = @transform_6, window_bounds = array<i64: 1, 128>}, {transform_indices = @transform_7, window_bounds = array<i64: 8, 128>}]} {
    %c0 = arith.constant 0 : index
    %c0_0 = arith.constant 0 : index
    %0 = vector.load %arg1[%c0, %c0_0] : memref<8x128xf32, #tpu.memory_space<vmem>>, vector<8x128xf32>
    %1 = arith.truncf %0 : vector<8x128xf32> to vector<8x128xbf16>
    %c0_1 = arith.constant 0 : index
    %c0_2 = arith.constant 0 : index
    %2 = vector.load %arg2[%c0_1, %c0_2] : memref<128x128xbf16, #tpu.memory_space<vmem>>, vector<128x128xbf16>
    %cst = arith.constant dense<0.000000e+00> : vector<8x128xf32>
    %3 = tpu.matmul %1, %2, %cst {dimension_numbers = #tpu.dot_dimension_numbers<[1], [0], [0], [1], [0, 0, 1, 1], [], []>} : vector<8x128xbf16>, vector<128x128xbf16>, vector<8x128xf32> -> vector<8x128xf32>
    %c0_3 = arith.constant 0 : index
    %c0_4 = arith.constant 0 : index
    %4 = vector.load %arg3[%c0_3, %c0_4] : memref<1x128xf32, #tpu.memory_space<vmem>>, vector<1x128xf32>
    %5 = vector.broadcast %4 : vector<1x128xf32> to vector<8x128xf32>
    %6 = arith.addf %3, %5 : vector<8x128xf32>
    %cst_5 = arith.constant 0.000000e+00 : f32
    %7 = vector.broadcast %cst_5 : f32 to vector<8x128xf32>
    %8 = arith.maximumf %6, %7 : vector<8x128xf32>
    %9 = arith.truncf %8 : vector<8x128xf32> to vector<8x128xbf16>
    %c0_6 = arith.constant 0 : index
    %c0_7 = arith.constant 0 : index
    %10 = vector.load %arg4[%c0_6, %c0_7] : memref<128x128xbf16, #tpu.memory_space<vmem>>, vector<128x128xbf16>
    %cst_8 = arith.constant dense<0.000000e+00> : vector<8x128xf32>
    %11 = tpu.matmul %9, %10, %cst_8 {dimension_numbers = #tpu.dot_dimension_numbers<[1], [0], [0], [1], [0, 0, 1, 1], [], []>} : vector<8x128xbf16>, vector<128x128xbf16>, vector<8x128xf32> -> vector<8x128xf32>
    %c0_9 = arith.constant 0 : index
    %c0_10 = arith.constant 0 : index
    %12 = vector.load %arg5[%c0_9, %c0_10] : memref<1x128xf32, #tpu.memory_space<vmem>>, vector<1x128xf32>
    %13 = vector.broadcast %12 : vector<1x128xf32> to vector<8x128xf32>
    %14 = arith.addf %11, %13 : vector<8x128xf32>
    %cst_11 = arith.constant 0.000000e+00 : f32
    %15 = vector.broadcast %cst_11 : f32 to vector<8x128xf32>
    %16 = arith.maximumf %14, %15 : vector<8x128xf32>
    %17 = arith.truncf %16 : vector<8x128xf32> to vector<8x128xbf16>
    %c0_12 = arith.constant 0 : index
    %c0_13 = arith.constant 0 : index
    %18 = vector.load %arg6[%c0_12, %c0_13] : memref<128x128xbf16, #tpu.memory_space<vmem>>, vector<128x128xbf16>
    %cst_14 = arith.constant dense<0.000000e+00> : vector<8x128xf32>
    %19 = tpu.matmul %17, %18, %cst_14 {dimension_numbers = #tpu.dot_dimension_numbers<[1], [0], [0], [1], [0, 0, 1, 1], [], []>} : vector<8x128xbf16>, vector<128x128xbf16>, vector<8x128xf32> -> vector<8x128xf32>
    %c0_15 = arith.constant 0 : index
    %c0_16 = arith.constant 0 : index
    %20 = vector.load %arg7[%c0_15, %c0_16] : memref<1x128xf32, #tpu.memory_space<vmem>>, vector<1x128xf32>
    %21 = vector.broadcast %20 : vector<1x128xf32> to vector<8x128xf32>
    %22 = arith.addf %19, %21 : vector<8x128xf32>
    %c0_17 = arith.constant 0 : index
    %c0_18 = arith.constant 0 : index
    %23 = vector.load %arg8[%c0_17, %c0_18] : memref<8x128xf32, #tpu.memory_space<vmem>>, vector<8x128xf32>
    tpu.vector_store %arg8[%c0_17, %c0_18], %22 {strides = array<i32>} : memref<8x128xf32, #tpu.memory_space<vmem>>, vector<8x128xf32>,
    return
  }
  func.func @transform_0(%arg0: i32) -> (i32, i32) {
    %c0_i32 = arith.constant 0 : i32
    %c0_i32_0 = arith.constant 0 : i32
    return %arg0, %c0_i32 : i32, i32
  }
  func.func @transform_1(%arg0: i32) -> (i32, i32) {
    %c0_i32 = arith.constant 0 : i32
    %c0_i32_0 = arith.constant 0 : i32
    %c0_i32_1 = arith.constant 0 : i32
    return %c0_i32, %c0_i32_0 : i32, i32
  }
  func.func @transform_2(%arg0: i32) -> (i32, i32) {
    %c0_i32 = arith.constant 0 : i32
    %c0_i32_0 = arith.constant 0 : i32
    %c0_i32_1 = arith.constant 0 : i32
    return %c0_i32, %c0_i32_0 : i32, i32
  }
  func.func @transform_3(%arg0: i32) -> (i32, i32) {
    %c0_i32 = arith.constant 0 : i32
    %c0_i32_0 = arith.constant 0 : i32
    %c0_i32_1 = arith.constant 0 : i32
    return %c0_i32, %c0_i32_0 : i32, i32
  }
  func.func @transform_4(%arg0: i32) -> (i32, i32) {
    %c0_i32 = arith.constant 0 : i32
    %c0_i32_0 = arith.constant 0 : i32
    %c0_i32_1 = arith.constant 0 : i32
    return %c0_i32, %c0_i32_0 : i32, i32
  }
  func.func @transform_5(%arg0: i32) -> (i32, i32) {
    %c0_i32 = arith.constant 0 : i32
    %c0_i32_0 = arith.constant 0 : i32
    %c0_i32_1 = arith.constant 0 : i32
    return %c0_i32, %c0_i32_0 : i32, i32
  }
  func.func @transform_6(%arg0: i32) -> (i32, i32) {
    %c0_i32 = arith.constant 0 : i32
    %c0_i32_0 = arith.constant 0 : i32
    %c0_i32_1 = arith.constant 0 : i32
    return %c0_i32, %c0_i32_0 : i32, i32
  }
  func.func @transform_7(%arg0: i32) -> (i32, i32) {
    %c0_i32 = arith.constant 0 : i32
    %c0_i32_0 = arith.constant 0 : i32
    return %arg0, %c0_i32 : i32, i32
  }
}

</mosaic_0001>

<llo_original>
// kernel: dnn_forward_pallas.1
$region0: #{dnn_forward_pallas.1}
  #allocation0 [shape = 'u32[]', space=smem, size = 0x4, offset = 0x4, fixed_abs, tag = 'smem constant byte address 0x4 - core index']
  #allocation1 [shape = 'u32[144,128]{1,0:T(1,128)}', space=vmem, size = 0x12000, scoped, tag = 'internal scratch']
  %s0 = inlined_call_operand.vmem [shape: f32[16,128], index: 0, kind: input, shape index: {}]
  %s1 = inlined_call_operand.vmem [shape: bf16[128,128], index: 1, kind: input, shape index: {}]
  %s2 = inlined_call_operand.vmem [shape: f32[1,128], index: 2, kind: input, shape index: {}]
  %s3 = inlined_call_operand.hbm [shape: bf16[128,128], index: 3, kind: input, shape index: {}]
  %s4 = inlined_call_operand.vmem [shape: f32[1,128], index: 4, kind: input, shape index: {}]
  %s5 = inlined_call_operand.hbm [shape: bf16[128,128], index: 5, kind: input, shape index: {}]
  %s6 = inlined_call_operand.vmem [shape: f32[1,128], index: 6, kind: input, shape index: {}]
  %s7 = inlined_call_operand.vmem [shape: f32[16,128], index: 7, kind: output, shape index: {}]
  %s8 = sld [smem:[#allocation0]]
  $region69: #{dnn_forward_pallas.1} parent=0
    _
  %s10 = ssub.s32 1, %s8
  %s11 = scalar_select 0, %s10, %s8
  $region1: #{dnn_forward_pallas.1} parent=0
    #allocation2 [shape = 'u8[32768]{0}', space=vmem, size = 0x8000, scoped, tag = 'input window, operand 3, single buffered']
    #allocation3 [shape = 's32[2]{0}', space=sflag, size = 0x8, scoped, tag = 'scoped memory for dnn_forward_pallas.1']
    #allocation4 [shape = 'u8[32768]{0}', space=vmem, size = 0x8000, scoped, tag = 'input window, operand 5, single buffered']
    #allocation5 [shape = 's32[1]{0}', space=sflag, size = 0x4, scoped, tag = 'scoped memory for dnn_forward_pallas.1']
    %12 = vsyncpa [#allocation3], 0
    %13 = vsyncpa [#allocation5], 0
    loop: start=0, step=1, limit=4
    $region2: #{dnn_forward_pallas.1} parent=1 // loop_pre_header
      _
    $region3: #{dnn_forward_pallas.1} parent=1 // loop_header
      %s15 = sphi 0, %s19
      %p16 = scmp.ge.s32.totalorder %s15, 4
      %s25 = sphi 0, %s27
      %s28 = sphi 0, %s25
      %s29 = sphi 0, %s28
      %s45 = sphi 0, %s29
      %s49 = sphi 0, %s49
      %s51 = sphi 0, %s49
      %s52 = sphi 0, %s51
      %s66 = sphi 0, %s52
      %s70 = sphi 0, %s70
      %s72 = sphi 0, %s70
      %s73 = sphi 0, %s72
      %s87 = sphi 0, %s73
      %s91 = sphi 0, %s91
      %s93 = sphi 0, %s91
      %s94 = sphi 0, %s93
      %s108 = sphi 0, %s94
      %s112 = sphi 0, %s112
      %s114 = sphi 0, %s112
      %s115 = sphi 0, %s114
      %s129 = sphi 0, %s115
      %s133 = sphi 0, %s133
      %s135 = sphi 0, %s133
      %s136 = sphi 0, %s135
      %s150 = sphi 0, %s136
      %s154 = sphi 0, %s154
      %s156 = sphi 0, %s154
      %s157 = sphi 0, %s156
      %s171 = sphi 0, %s157
      %s177 = sphi 0, %s179
      %s180 = sphi 0, %s177
      %s181 = sphi 0, %s180
      %s197 = sphi 0, %s181
    $region4: #{dnn_forward_pallas.1} parent=1 // loop_header_branch
      %18 = sbr.rel (%p16) target = $region8
    $region5: #{dnn_forward_pallas.1} parent=1 // loop_body
      %s20 = ssub.s32 %s15, 1
      %s21 = ssub.s32 %s15, 2
      %s22 = sadd.s32 %s15, 1
      %s23 = ssub.s32 %s15, %s22
      %p24 = scmp.eq.s32.totalorder %s23, 0
      %s26 = sadd.s32 %s25, 1
      %s27 = scalar_select %p24, %s25, %s26
      %p30 = pneg %p24
      %p31 = scmp.eq.s32.totalorder %s15, 1
      %p32 = por %p30, %p31
      %p33 = scmp.ne.s32.totalorder %s25, %s28
      %p34 = scmp.eq.s32.totalorder %s15, 0
      %p35 = por %p33, %p34
      %p36 = scmp.ne.s32.totalorder %s25, %s28
      %p37 = scmp.eq.s32.totalorder %s20, 1
      %p38 = por %p36, %p37
      %p39 = scmp.ne.s32.totalorder %s28, %s29
      %p40 = scmp.eq.s32.totalorder %s20, 0
      %p41 = por %p39, %p40
      %p42 = scmp.ne.s32.totalorder %s28, %s29
      %p43 = scmp.eq.s32.totalorder %s21, 1
      %p44 = por %p42, %p43
      %p46 = scmp.ne.s32.totalorder %s29, %s45
      %p47 = scmp.eq.s32.totalorder %s21, 0
      %p48 = por %p46, %p47
      %s50 = sadd.s32 %s49, 1
      %p53 = scmp.eq.s32.totalorder %s15, 1
      %p54 = scmp.ne.s32.totalorder %s49, %s51
      %p55 = scmp.eq.s32.totalorder %s15, 0
      %p56 = por %p54, %p55
      %p57 = scmp.ne.s32.totalorder %s49, %s51
      %p58 = scmp.eq.s32.totalorder %s20, 1
      %p59 = por %p57, %p58
      %p60 = scmp.ne.s32.totalorder %s51, %s52
      %p61 = scmp.eq.s32.totalorder %s20, 0
      %p62 = por %p60, %p61
      %p63 = scmp.ne.s32.totalorder %s51, %s52
      %p64 = scmp.eq.s32.totalorder %s21, 1
      %p65 = por %p63, %p64
      %p67 = scmp.ne.s32.totalorder %s52, %s66
      %p68 = scmp.eq.s32.totalorder %s21, 0
      %p69 = por %p67, %p68
      %s71 = sadd.s32 %s70, 1
      %p74 = scmp.eq.s32.totalorder %s15, 1
      %p75 = scmp.ne.s32.totalorder %s70, %s72
      %p76 = scmp.eq.s32.totalorder %s15, 0
      %p77 = por %p75, %p76
      %p78 = scmp.ne.s32.totalorder %s70, %s72
      %p79 = scmp.eq.s32.totalorder %s20, 1
      %p80 = por %p78, %p79
      %p81 = scmp.ne.s32.totalorder %s72, %s73
      %p82 = scmp.eq.s32.totalorder %s20, 0
      %p83 = por %p81, %p82
      %p84 = scmp.ne.s32.totalorder %s72, %s73
      %p85 = scmp.eq.s32.totalorder %s21, 1
      %p86 = por %p84, %p85
      %p88 = scmp.ne.s32.totalorder %s73, %s87
      %p89 = scmp.eq.s32.totalorder %s21, 0
      %p90 = por %p88, %p89
      %s92 = sadd.s32 %s91, 1
      %p95 = scmp.eq.s32.totalorder %s15, 1
      %p96 = scmp.ne.s32.totalorder %s91, %s93
      %p97 = scmp.eq.s32.totalorder %s15, 0
      %p98 = por %p96, %p97
      %p99 = scmp.ne.s32.totalorder %s91, %s93
      %p100 = scmp.eq.s32.totalorder %s20, 1
      %p101 = por %p99, %p100
      %p102 = scmp.ne.s32.totalorder %s93, %s94
      %p103 = scmp.eq.s32.totalorder %s20, 0
      %p104 = por %p102, %p103
      %p105 = scmp.ne.s32.totalorder %s93, %s94
      %p106 = scmp.eq.s32.totalorder %s21, 1
      %p107 = por %p105, %p106
      %p109 = scmp.ne.s32.totalorder %s94, %s108
      %p110 = scmp.eq.s32.totalorder %s21, 0
      %p111 = por %p109, %p110
      %s113 = sadd.s32 %s112, 1
      %p116 = scmp.eq.s32.totalorder %s15, 1
      %p117 = scmp.ne.s32.totalorder %s112, %s114
      %p118 = scmp.eq.s32.totalorder %s15, 0
      %p119 = por %p117, %p118
      %p120 = scmp.ne.s32.totalorder %s112, %s114
      %p121 = scmp.eq.s32.totalorder %s20, 1
      %p122 = por %p120, %p121
      %p123 = scmp.ne.s32.totalorder %s114, %s115
      %p124 = scmp.eq.s32.totalorder %s20, 0
      %p125 = por %p123, %p124
      %p126 = scmp.ne.s32.totalorder %s114, %s115
      %p127 = scmp.eq.s32.totalorder %s21, 1
      %p128 = por %p126, %p127
      %p130 = scmp.ne.s32.totalorder %s115, %s129
      %p131 = scmp.eq.s32.totalorder %s21, 0
      %p132 = por %p130, %p131
      %s134 = sadd.s32 %s133, 1
      %p137 = scmp.eq.s32.totalorder %s15, 1
      %p138 = scmp.ne.s32.totalorder %s133, %s135
      %p139 = scmp.eq.s32.totalorder %s15, 0
      %p140 = por %p138, %p139
      %p141 = scmp.ne.s32.totalorder %s133, %s135
      %p142 = scmp.eq.s32.totalorder %s20, 1
      %p143 = por %p141, %p142
      %p144 = scmp.ne.s32.totalorder %s135, %s136
      %p145 = scmp.eq.s32.totalorder %s20, 0
      %p146 = por %p144, %p145
      %p147 = scmp.ne.s32.totalorder %s135, %s136
      %p148 = scmp.eq.s32.totalorder %s21, 1
      %p149 = por %p147, %p148
      %p151 = scmp.ne.s32.totalorder %s136, %s150
      %p152 = scmp.eq.s32.totalorder %s21, 0
      %p153 = por %p151, %p152
      %s155 = sadd.s32 %s154, 1
      %p158 = scmp.eq.s32.totalorder %s15, 1
      %p159 = scmp.ne.s32.totalorder %s154, %s156
      %p160 = scmp.eq.s32.totalorder %s15, 0
      %p161 = por %p159, %p160
      %p162 = scmp.ne.s32.totalorder %s154, %s156
      %p163 = scmp.eq.s32.totalorder %s20, 1
      %p164 = por %p162, %p163
      %p165 = scmp.ne.s32.totalorder %s156, %s157
      %p166 = scmp.eq.s32.totalorder %s20, 0
      %p167 = por %p165, %p166
      %p168 = scmp.ne.s32.totalorder %s156, %s157
      %p169 = scmp.eq.s32.totalorder %s21, 1
      %p170 = por %p168, %p169
      %p172 = scmp.ne.s32.totalorder %s157, %s171
      %p173 = scmp.eq.s32.totalorder %s21, 0
      %p174 = por %p172, %p173
      %s175 = ssub.s32 %s15, %s22
      %p176 = scmp.eq.s32.totalorder %s175, 0
      %s178 = sadd.s32 %s177, 1
      %s179 = scalar_select %p176, %s177, %s178
      %p182 = pneg %p176
      %p183 = scmp.eq.s32.totalorder %s15, 1
      %p184 = por %p182, %p183
      %p185 = scmp.ne.s32.totalorder %s177, %s180
      %p186 = scmp.eq.s32.totalorder %s15, 0
      %p187 = por %p185, %p186
      %p188 = scmp.ne.s32.totalorder %s177, %s180
      %p189 = scmp.eq.s32.totalorder %s20, 1
      %p190 = por %p188, %p189
      %p191 = scmp.ne.s32.totalorder %s180, %s181
      %p192 = scmp.eq.s32.totalorder %s20, 0
      %p193 = por %p191, %p192
      %p194 = scmp.ne.s32.totalorder %s180, %s181
      %p195 = scmp.eq.s32.totalorder %s21, 1
      %p196 = por %p194, %p195
      %p198 = scmp.ne.s32.totalorder %s181, %s197
      %p199 = scmp.eq.s32.totalorder %s21, 0
      %p200 = por %p198, %p199
      %p201 = scmp.le.s32.totalorder 1, %s15
      %p202 = scmp.lt.s32.totalorder %s15, 3
      %p203 = pnand %p201, %p202
      %p204 = pneg %p203
      // Predicated region
      $region9: #{dnn_forward_pallas.1} parent=5 // pred_check
        _
      $region10: #{dnn_forward_pallas.1} parent=5 // pred_check_branch
        %206 = sbr.rel (%p203) target = $region12
      $region11: #{dnn_forward_pallas.1} parent=5 // pred_region
        %s207 = ssub.s32 %s15, 1
        // Predicated region
        $region13: #{dnn_forward_pallas.1} parent=11 // pred_check
          %p208 = pneg %p62
        $region14: #{dnn_forward_pallas.1} parent=11 // pred_check_branch
          %210 = sbr.rel (%p208) target = $region16
        $region15: #{dnn_forward_pallas.1} parent=11 // pred_region
          _
        $region16: #{dnn_forward_pallas.1} parent=11 // pred_fallthru
          _
        // Predicated region
        $region17: #{dnn_forward_pallas.1} parent=11 // pred_check
          %p211 = pneg %p83
        $region18: #{dnn_forward_pallas.1} parent=11 // pred_check_branch
          %213 = sbr.rel (%p211) target = $region20
        $region19: #{dnn_forward_pallas.1} parent=11 // pred_region
          _
        $region20: #{dnn_forward_pallas.1} parent=11 // pred_fallthru
          _
        // Predicated region
        $region21: #{dnn_forward_pallas.1} parent=11 // pred_check
          %p214 = pneg %p104
        $region22: #{dnn_forward_pallas.1} parent=11 // pred_check_branch
          %216 = sbr.rel (%p214) target = $region24
        $region23: #{dnn_forward_pallas.1} parent=11 // pred_region
          %s218 = ssub.s32 1024, 1024
          %219 = vsyncadd [#allocation3], %s218
          %s220 = sshll.u32 [#allocation2], 4
          %s221 = int_to_ptr.vmem [resolvable:$true] %s220
          %226 = dma.hbm_to_vmem [thread:$0]  %s3, 1024, %s221, [#allocation3], 64, 64, 4
        $region24: #{dnn_forward_pallas.1} parent=11 // pred_fallthru
          _
        // Predicated region
        $region25: #{dnn_forward_pallas.1} parent=11 // pred_check
          %p227 = pneg %p125
        $region26: #{dnn_forward_pallas.1} parent=11 // pred_check_branch
          %229 = sbr.rel (%p227) target = $region28
        $region27: #{dnn_forward_pallas.1} parent=11 // pred_region
          _
        $region28: #{dnn_forward_pallas.1} parent=11 // pred_fallthru
          _
        // Predicated region
        $region29: #{dnn_forward_pallas.1} parent=11 // pred_check
          %p230 = pneg %p146
        $region30: #{dnn_forward_pallas.1} parent=11 // pred_check_branch
          %232 = sbr.rel (%p230) target = $region32
        $region31: #{dnn_forward_pallas.1} parent=11 // pred_region
          %s234 = ssub.s32 1024, 1024
          %235 = vsyncadd [#allocation5], %s234
          %s236 = sshll.u32 [#allocation4], 4
          %s237 = int_to_ptr.vmem [resolvable:$true] %s236
          %242 = dma.hbm_to_vmem [thread:$0]  %s5, 1024, %s237, [#allocation5], 64, 64, 4
        $region32: #{dnn_forward_pallas.1} parent=11 // pred_fallthru
          _
        // Predicated region
        $region33: #{dnn_forward_pallas.1} parent=11 // pred_check
          %p243 = pneg %p167
        $region34: #{dnn_forward_pallas.1} parent=11 // pred_check_branch
          %245 = sbr.rel (%p243) target = $region36
        $region35: #{dnn_forward_pallas.1} parent=11 // pred_region
          _
        $region36: #{dnn_forward_pallas.1} parent=11 // pred_fallthru
          _
      $region12: #{dnn_forward_pallas.1} parent=5 // pred_fallthru
        _
      %p246 = scmp.lt.s32.totalorder %s15, 2
      // Predicated region
      $region37: #{dnn_forward_pallas.1} parent=5 // pred_check
        %p247 = pneg %p246
      $region38: #{dnn_forward_pallas.1} parent=5 // pred_check_branch
        %249 = sbr.rel (%p247) target = $region40
      $region39: #{dnn_forward_pallas.1} parent=5 // pred_region
        // Predicated region
        $region41: #{dnn_forward_pallas.1} parent=39 // pred_check
          %p250 = pneg %p35
        $region42: #{dnn_forward_pallas.1} parent=39 // pred_check_branch
          %252 = sbr.rel (%p250) target = $region44
        $region43: #{dnn_forward_pallas.1} parent=39 // pred_region
          %p253 = scmp.lt.s32.totalorder %s15, 1
          %s254 = scalar_select %p253, %s15, 1
          %s255 = smul.addr %s254, 8
          %s256 = scalar_lea.vmem %s0, %s255
        $region44: #{dnn_forward_pallas.1} parent=39 // pred_fallthru
          _
      $region40: #{dnn_forward_pallas.1} parent=5 // pred_fallthru
        _
      %p257 = scmp.le.s32.totalorder 1, %s15
      %p258 = scmp.lt.s32.totalorder %s15, 3
      %p259 = pnand %p257, %p258
      %p260 = pneg %p259
      // Predicated region
      $region45: #{dnn_forward_pallas.1} parent=5 // pred_check
        _
      $region46: #{dnn_forward_pallas.1} parent=5 // pred_check_branch
        %262 = sbr.rel (%p259) target = $region48
      $region47: #{dnn_forward_pallas.1} parent=5 // pred_region
        %s263 = ssub.s32 %s15, 1
        // Predicated region
        $region49: #{dnn_forward_pallas.1} parent=47 // pred_check
          %p264 = pneg %p104
        $region50: #{dnn_forward_pallas.1} parent=47 // pred_check_branch
          %266 = sbr.rel (%p264) target = $region52
        $region51: #{dnn_forward_pallas.1} parent=47 // pred_region
          %267 = dma.done [#allocation3], 1024
        $region52: #{dnn_forward_pallas.1} parent=47 // pred_fallthru
          _
        // Predicated region
        $region53: #{dnn_forward_pallas.1} parent=47 // pred_check
          %p268 = pneg %p146
        $region54: #{dnn_forward_pallas.1} parent=47 // pred_check_branch
          %270 = sbr.rel (%p268) target = $region56
        $region55: #{dnn_forward_pallas.1} parent=47 // pred_region
          %271 = dma.done [#allocation5], 1024
        $region56: #{dnn_forward_pallas.1} parent=47 // pred_fallthru
          _
        %p272 = scmp.lt.s32.totalorder %s20, 1
        %s273 = scalar_select %p272, %s20, 1
        %s274 = smul.addr %s273, 8
        %s275 = scalar_lea.vmem %s0, %s274
        %p276 = pneg %p41
        %p277 = pneg %p38
        %p278 = pneg %p62
        %p279 = pneg %p59
        %p280 = pneg %p83
        %p281 = pneg %p80
        %p282 = pneg %p104
        %p283 = pneg %p101
        %p284 = pneg %p125
        %p285 = pneg %p122
        %p286 = pneg %p146
        %p287 = pneg %p143
        %p288 = pneg %p167
        %p289 = pneg %p164
        %p290 = pneg %p193
        %p291 = pneg %p190
        %p292 = scmp.lt.s32.totalorder %s20, 1
        %s293 = scalar_select %p292, %s20, 1
        %s294 = smul.addr %s293, 8
        %s295 = scalar_lea.vmem %s7, %s294
        %p296 = scmp.lt.s32.totalorder %s20, 1
        %s297 = scalar_select %p296, %s20, 1
        %s298 = smul.addr %s297, 8
        %s299 = scalar_lea.vmem %s0, %s298
        %p300 = scmp.lt.s32.totalorder %s20, 1
        %s301 = scalar_select %p300, %s20, 1
        %s302 = smul.addr %s301, 8
        %s303 = scalar_lea.vmem %s7, %s302
        %v305 = vld [vmem:[%s299] sm:$0xff]
        %v306 = vpack.c.bf16 %v305, %v305
        %v307 = vld [vmem:[%s1] sm:$0xf]
        %v308 = vld [vmem:[%s1 + $0x4] sm:$0xf]
        %v309 = vld [vmem:[%s1 + $0x8] sm:$0xf]
        %v310 = vld [vmem:[%s1 + $0xc] sm:$0xf]
        %v311 = vld [vmem:[%s1 + $0x10] sm:$0xf]
        %v312 = vld [vmem:[%s1 + $0x14] sm:$0xf]
        %v313 = vld [vmem:[%s1 + $0x18] sm:$0xf]
        %v314 = vld [vmem:[%s1 + $0x1c] sm:$0xf]
        %v315 = vld [vmem:[%s1 + $0x20] sm:$0xf]
        %v316 = vld [vmem:[%s1 + $0x24] sm:$0xf]
        %v317 = vld [vmem:[%s1 + $0x28] sm:$0xf]
        %v318 = vld [vmem:[%s1 + $0x2c] sm:$0xf]
        %v319 = vld [vmem:[%s1 + $0x30] sm:$0xf]
        %v320 = vld [vmem:[%s1 + $0x34] sm:$0xf]
        %v321 = vld [vmem:[%s1 + $0x38] sm:$0xf]
        %v322 = vld [vmem:[%s1 + $0x3c] sm:$0xf]
        %v323 = vld [vmem:[%s2] sm:$0x1]
        %v325 = vlaneseq
        %v326 = vshrl.u32 %v325, 7
        %v327 = vsub.s32 0, %v326
        %v328 = vrot.slane %v323, %v327
        %v346 = vunpack.c.l.b16 %v307
        %v347 = vunpack.c.l.b16 %v308
        %v348 = vunpack.c.l.b16 %v309
        %v349 = vunpack.c.l.b16 %v310
        %v350 = vunpack.c.l.b16 %v311
        %v351 = vunpack.c.l.b16 %v312
        %v352 = vunpack.c.l.b16 %v313
        %v353 = vunpack.c.l.b16 %v314
        %v354 = vunpack.c.l.b16 %v315
        %v355 = vunpack.c.l.b16 %v316
        %v356 = vunpack.c.l.b16 %v317
        %v357 = vunpack.c.l.b16 %v318
        %v358 = vunpack.c.l.b16 %v319
        %v359 = vunpack.c.l.b16 %v320
        %v360 = vunpack.c.l.b16 %v321
        %v361 = vunpack.c.l.b16 %v322
        %v362 = vpack.c.b16 %v347, %v346
        %v363 = vpack.c.b16 %v349, %v348
        %v364 = vpack.c.b16 %v351, %v350
        %v365 = vpack.c.b16 %v353, %v352
        %v366 = vpack.c.b16 %v355, %v354
        %v367 = vpack.c.b16 %v357, %v356
        %v368 = vpack.c.b16 %v359, %v358
        %v369 = vpack.c.b16 %v361, %v360
        %378 = vmatprep.subr.bf16.mxu0 0
        %379 = vmatpush1.bf16.msra.mxu0 %v369
        %380 = vmatprep.subr.bf16.mxu0 0
        %381 = vmatpush1.bf16.msra.mxu0 %v368
        %382 = vmatprep.subr.bf16.mxu0 0
        %383 = vmatpush1.bf16.msra.mxu0 %v367
        %384 = vmatprep.subr.bf16.mxu0 0
        %385 = vmatpush1.bf16.msra.mxu0 %v366
        %386 = vmatprep.subr.bf16.mxu0 0
        %387 = vmatpush1.bf16.msra.mxu0 %v365
        %388 = vmatprep.subr.bf16.mxu0 0
        %389 = vmatpush1.bf16.msra.mxu0 %v364
        %390 = vmatprep.subr.bf16.mxu0 0
        %391 = vmatpush1.bf16.msra.mxu0 %v363
        %392 = vmatprep.subr.bf16.mxu0 0
        %393 = vmatpush1.bf16.msra.mxu0 %v362
        %394 = vmatprep.subr.bf16.mxu0 0
        %395 = vmatpush2.bf16.msra.mxu0 0
        %396 = vmatprep.subr.bf16.mxu0 0
        %397 = vmatpush2.bf16.msra.mxu0 0
        %398 = vmatprep.subr.bf16.mxu0 0
        %399 = vmatpush2.bf16.msra.mxu0 0
        %400 = vmatprep.subr.bf16.mxu0 0
        %401 = vmatpush2.bf16.msra.mxu0 0
        %402 = vmatprep.subr.bf16.mxu0 0
        %403 = vmatpush2.bf16.msra.mxu0 0
        %404 = vmatprep.subr.bf16.mxu0 0
        %405 = vmatpush2.bf16.msra.mxu0 0
        %406 = vmatprep.subr.bf16.mxu0 0
        %407 = vmatpush2.bf16.msra.mxu0 0
        %408 = vmatprep.subr.bf16.mxu0 0
        %409 = vmatpush2.bf16.msra.mxu0 0
        %410 = vmatprep.mubr.bf16.mxu0 0
        %411 = vmatmul.mubr.bf16.gmra.mxu0 %v306
        %v412 = vpop.f32.mrf.mxu0
        %v413 = vadd.f32 %v328, %v412
        %v414 = vpop.f32.mrf.mxu0
        %v415 = vpop.f32.mrf.mxu0
        %v416 = vpop.f32.mrf.mxu0
        %417 = vdwg.mxu0
        %v418 = vmax.f32 %v413, 0.0
        %v419 = vpack.c.bf16 %v418, %v418
        %v420 = vld [vmem:[#allocation2] sm:$0xf]
        %v421 = vld [vmem:[#allocation2 + $0x4] sm:$0xf]
        %v422 = vld [vmem:[#allocation2 + $0x8] sm:$0xf]
        %v423 = vld [vmem:[#allocation2 + $0xc] sm:$0xf]
        %v424 = vld [vmem:[#allocation2 + $0x10] sm:$0xf]
        %v425 = vld [vmem:[#allocation2 + $0x14] sm:$0xf]
        %v426 = vld [vmem:[#allocation2 + $0x18] sm:$0xf]
        %v427 = vld [vmem:[#allocation2 + $0x1c] sm:$0xf]
        %v428 = vld [vmem:[#allocation2 + $0x20] sm:$0xf]
        %v429 = vld [vmem:[#allocation2 + $0x24] sm:$0xf]
        %v430 = vld [vmem:[#allocation2 + $0x28] sm:$0xf]
        %v431 = vld [vmem:[#allocation2 + $0x2c] sm:$0xf]
        %v432 = vld [vmem:[#allocation2 + $0x30] sm:$0xf]
        %v433 = vld [vmem:[#allocation2 + $0x34] sm:$0xf]
        %v434 = vld [vmem:[#allocation2 + $0x38] sm:$0xf]
        %v435 = vld [vmem:[#allocation2 + $0x3c] sm:$0xf]
        %v436 = vld [vmem:[%s4] sm:$0x1]
        %v438 = vlaneseq
        %v439 = vshrl.u32 %v438, 7
        %v440 = vsub.s32 0, %v439
        %v441 = vrot.slane %v436, %v440
        %v459 = vunpack.c.l.b16 %v420
        %v460 = vunpack.c.l.b16 %v421
        %v461 = vunpack.c.l.b16 %v422
        %v462 = vunpack.c.l.b16 %v423
        %v463 = vunpack.c.l.b16 %v424
        %v464 = vunpack.c.l.b16 %v425
        %v465 = vunpack.c.l.b16 %v426
        %v466 = vunpack.c.l.b16 %v427
        %v467 = vunpack.c.l.b16 %v428
        %v468 = vunpack.c.l.b16 %v429
        %v469 = vunpack.c.l.b16 %v430
        %v470 = vunpack.c.l.b16 %v431
        %v471 = vunpack.c.l.b16 %v432
        %v472 = vunpack.c.l.b16 %v433
        %v473 = vunpack.c.l.b16 %v434
        %v474 = vunpack.c.l.b16 %v435
        %v475 = vpack.c.b16 %v460, %v459
        %v476 = vpack.c.b16 %v462, %v461
        %v477 = vpack.c.b16 %v464, %v463
        %v478 = vpack.c.b16 %v466, %v465
        %v479 = vpack.c.b16 %v468, %v467
        %v480 = vpack.c.b16 %v470, %v469
        %v481 = vpack.c.b16 %v472, %v471
        %v482 = vpack.c.b16 %v474, %v473
        %491 = vmatprep.subr.bf16.mxu0 0
        %492 = vmatpush1.bf16.msra.mxu0 %v482
        %493 = vmatprep.subr.bf16.mxu0 0
        %494 = vmatpush1.bf16.msra.mxu0 %v481
        %495 = vmatprep.subr.bf16.mxu0 0
        %496 = vmatpush1.bf16.msra.mxu0 %v480
        %497 = vmatprep.subr.bf16.mxu0 0
        %498 = vmatpush1.bf16.msra.mxu0 %v479
        %499 = vmatprep.subr.bf16.mxu0 0
        %500 = vmatpush1.bf16.msra.mxu0 %v478
        %501 = vmatprep.subr.bf16.mxu0 0
        %502 = vmatpush1.bf16.msra.mxu0 %v477
        %503 = vmatprep.subr.bf16.mxu0 0
        %504 = vmatpush1.bf16.msra.mxu0 %v476
        %505 = vmatprep.subr.bf16.mxu0 0
        %506 = vmatpush1.bf16.msra.mxu0 %v475
        %507 = vmatprep.subr.bf16.mxu0 0
        %508 = vmatpush2.bf16.msra.mxu0 0
        %509 = vmatprep.subr.bf16.mxu0 0
        %510 = vmatpush2.bf16.msra.mxu0 0
        %511 = vmatprep.subr.bf16.mxu0 0
        %512 = vmatpush2.bf16.msra.mxu0 0
        %513 = vmatprep.subr.bf16.mxu0 0
        %514 = vmatpush2.bf16.msra.mxu0 0
        %515 = vmatprep.subr.bf16.mxu0 0
        %516 = vmatpush2.bf16.msra.mxu0 0
        %517 = vmatprep.subr.bf16.mxu0 0
        %518 = vmatpush2.bf16.msra.mxu0 0
        %519 = vmatprep.subr.bf16.mxu0 0
        %520 = vmatpush2.bf16.msra.mxu0 0
        %521 = vmatprep.subr.bf16.mxu0 0
        %522 = vmatpush2.bf16.msra.mxu0 0
        %523 = vmatprep.mubr.bf16.mxu0 0
        %524 = vmatmul.mubr.bf16.gmra.mxu0 %v419
        %v525 = vpop.f32.mrf.mxu0
        %v526 = vadd.f32 %v441, %v525
        %v527 = vpop.f32.mrf.mxu0
        %v528 = vpop.f32.mrf.mxu0
        %v529 = vpop.f32.mrf.mxu0
        %530 = vdwg.mxu0
        %v531 = vmax.f32 %v526, 0.0
        %v532 = vpack.c.bf16 %v531, %v531
        %v533 = vld [vmem:[#allocation4] sm:$0xf]
        %v534 = vld [vmem:[#allocation4 + $0x4] sm:$0xf]
        %v535 = vld [vmem:[#allocation4 + $0x8] sm:$0xf]
        %v536 = vld [vmem:[#allocation4 + $0xc] sm:$0xf]
        %v537 = vld [vmem:[#allocation4 + $0x10] sm:$0xf]
        %v538 = vld [vmem:[#allocation4 + $0x14] sm:$0xf]
        %v539 = vld [vmem:[#allocation4 + $0x18] sm:$0xf]
        %v540 = vld [vmem:[#allocation4 + $0x1c] sm:$0xf]
        %v541 = vld [vmem:[#allocation4 + $0x20] sm:$0xf]
        %v542 = vld [vmem:[#allocation4 + $0x24] sm:$0xf]
        %v543 = vld [vmem:[#allocation4 + $0x28] sm:$0xf]
        %v544 = vld [vmem:[#allocation4 + $0x2c] sm:$0xf]
        %v545 = vld [vmem:[#allocation4 + $0x30] sm:$0xf]
        %v546 = vld [vmem:[#allocation4 + $0x34] sm:$0xf]
        %v547 = vld [vmem:[#allocation4 + $0x38] sm:$0xf]
        %v548 = vld [vmem:[#allocation4 + $0x3c] sm:$0xf]
        %v549 = vld [vmem:[%s6] sm:$0x1]
        %v551 = vlaneseq
        %v552 = vshrl.u32 %v551, 7
        %v553 = vsub.s32 0, %v552
        %v554 = vrot.slane %v549, %v553
        %v572 = vunpack.c.l.b16 %v533
        %v573 = vunpack.c.l.b16 %v534
        %v574 = vunpack.c.l.b16 %v535
        %v575 = vunpack.c.l.b16 %v536
        %v576 = vunpack.c.l.b16 %v537
        %v577 = vunpack.c.l.b16 %v538
        %v578 = vunpack.c.l.b16 %v539
        %v579 = vunpack.c.l.b16 %v540
        %v580 = vunpack.c.l.b16 %v541
        %v581 = vunpack.c.l.b16 %v542
        %v582 = vunpack.c.l.b16 %v543
        %v583 = vunpack.c.l.b16 %v544
        %v584 = vunpack.c.l.b16 %v545
        %v585 = vunpack.c.l.b16 %v546
        %v586 = vunpack.c.l.b16 %v547
        %v587 = vunpack.c.l.b16 %v548
        %v588 = vpack.c.b16 %v573, %v572
        %v589 = vpack.c.b16 %v575, %v574
        %v590 = vpack.c.b16 %v577, %v576
        %v591 = vpack.c.b16 %v579, %v578
        %v592 = vpack.c.b16 %v581, %v580
        %v593 = vpack.c.b16 %v583, %v582
        %v594 = vpack.c.b16 %v585, %v584
        %v595 = vpack.c.b16 %v587, %v586
        %604 = vmatprep.subr.bf16.mxu0 0
        %605 = vmatpush1.bf16.msra.mxu0 %v595
        %606 = vmatprep.subr.bf16.mxu0 0
        %607 = vmatpush1.bf16.msra.mxu0 %v594
        %608 = vmatprep.subr.bf16.mxu0 0
        %609 = vmatpush1.bf16.msra.mxu0 %v593
        %610 = vmatprep.subr.bf16.mxu0 0
        %611 = vmatpush1.bf16.msra.mxu0 %v592
        %612 = vmatprep.subr.bf16.mxu0 0
        %613 = vmatpush1.bf16.msra.mxu0 %v591
        %614 = vmatprep.subr.bf16.mxu0 0
        %615 = vmatpush1.bf16.msra.mxu0 %v590
        %616 = vmatprep.subr.bf16.mxu0 0
        %617 = vmatpush1.bf16.msra.mxu0 %v589
        %618 = vmatprep.subr.bf16.mxu0 0
        %619 = vmatpush1.bf16.msra.mxu0 %v588
        %620 = vmatprep.subr.bf16.mxu0 0
        %621 = vmatpush2.bf16.msra.mxu0 0
        %622 = vmatprep.subr.bf16.mxu0 0
        %623 = vmatpush2.bf16.msra.mxu0 0
        %624 = vmatprep.subr.bf16.mxu0 0
        %625 = vmatpush2.bf16.msra.mxu0 0
        %626 = vmatprep.subr.bf16.mxu0 0
        %627 = vmatpush2.bf16.msra.mxu0 0
        %628 = vmatprep.subr.bf16.mxu0 0
        %629 = vmatpush2.bf16.msra.mxu0 0
        %630 = vmatprep.subr.bf16.mxu0 0
        %631 = vmatpush2.bf16.msra.mxu0 0
        %632 = vmatprep.subr.bf16.mxu0 0
        %633 = vmatpush2.bf16.msra.mxu0 0
        %634 = vmatprep.subr.bf16.mxu0 0
        %635 = vmatpush2.bf16.msra.mxu0 0
        %636 = vmatprep.mubr.bf16.mxu0 0
        %637 = vmatmul.mubr.bf16.gmra.mxu0 %v532
        %v638 = vpop.f32.mrf.mxu0
        %v639 = vadd.f32 %v554, %v638
        %v640 = vpop.f32.mrf.mxu0
        %v641 = vpop.f32.mrf.mxu0
        %v642 = vpop.f32.mrf.mxu0
        %643 = vdwg.mxu0
        %644 = vst [vmem:[%s303] sm:$0xff] %v639
        %p645 = scmp.lt.s32.totalorder %s20, 1
        %s646 = scalar_select %p645, %s20, 1
        %s647 = smul.addr %s646, 8
        %s648 = scalar_lea.vmem %s7, %s647
        // Predicated region
        $region57: #{dnn_forward_pallas.1} parent=47 // pred_check
          %p649 = pneg %p190
        $region58: #{dnn_forward_pallas.1} parent=47 // pred_check_branch
          %651 = sbr.rel (%p649) target = $region60
        $region59: #{dnn_forward_pallas.1} parent=47 // pred_region
          _
        $region60: #{dnn_forward_pallas.1} parent=47 // pred_fallthru
          _
      $region48: #{dnn_forward_pallas.1} parent=5 // pred_fallthru
        _
      %p652 = scmp.le.s32.totalorder 2, %s15
      // Predicated region
      $region61: #{dnn_forward_pallas.1} parent=5 // pred_check
        %p653 = pneg %p652
      $region62: #{dnn_forward_pallas.1} parent=5 // pred_check_branch
        %655 = sbr.rel (%p653) target = $region64
      $region63: #{dnn_forward_pallas.1} parent=5 // pred_region
        %s656 = ssub.s32 %s15, 2
        // Predicated region
        $region65: #{dnn_forward_pallas.1} parent=63 // pred_check
          %p657 = pneg %p196
        $region66: #{dnn_forward_pallas.1} parent=63 // pred_check_branch
          %659 = sbr.rel (%p657) target = $region68
        $region67: #{dnn_forward_pallas.1} parent=63 // pred_region
          %p660 = scmp.lt.s32.totalorder %s21, 1
          %s661 = scalar_select %p660, %s21, 1
          %s662 = smul.addr %s661, 8
          %s663 = scalar_lea.vmem %s7, %s662
        $region68: #{dnn_forward_pallas.1} parent=63 // pred_fallthru
          _
      $region64: #{dnn_forward_pallas.1} parent=5 // pred_fallthru
        _
    $region6: #{dnn_forward_pallas.1} parent=1 // loop_footer
      %s19 = sadd.s32 1, %s15
    $region7: #{dnn_forward_pallas.1} parent=1 // loop_footer_branch
      %14 = sbr.rel target = $region3
    $region8: #{dnn_forward_pallas.1} parent=1 // loop_exit
      _
    %664 = vsyncpa [#allocation3], 1
    %s665 = scalar_lea.sflag [#allocation3], 1
    %666 = vsyncpa %s665, 1
    %667 = vsyncpa [#allocation5], 1

</llo_original>
